<compile_context>
chip_gen: v5e
topology: v5e:2x2
jax: 0.10.0
libtpu: 0.0.40
codegen_flags: <defaults>
</compile_context>

<pallas_src>
import jax
import jax.numpy as jnp
from jax.experimental import pallas as pl
from jax.experimental.pallas import tpu as pltpu

_IMAGENET_MEAN = (0.485, 0.456, 0.406)
_IMAGENET_STD = (0.229, 0.224, 0.225)

# Minimum sublane multiple per element byte-width (f32:8, bf16/f16:16, u8/i8:32).
_MIN_SUBLANES = {4: 8, 2: 16, 1: 32}


def _cdiv(a, b):
    return -(-a // b)


def _round_up(a, b):
    return _cdiv(a, b) * b


def _make_normalize_kernel(mean_vals, inv_std_vals):
    """Kernel factory: per-channel (x - mean) * (1/std) with constants baked in."""

    def kernel(x_ref, o_ref):
        # x_ref / o_ref: (C, T, 128) blocks; last two dims are sublane/lane dense.
        # Static unroll over the (tiny, compile-time) channel dim; mean/inv_std
        # are Python floats -> free scalar splats, no SMEM/VMEM operands needed.
        for c in range(len(mean_vals)):
            x = x_ref[c].astype(jnp.float32)  # f32 compute: HBM-bound kernel, safe on v5e
            o_ref[c] = ((x - mean_vals[c]) * inv_std_vals[c]).astype(o_ref.dtype)

    return kernel


def _choose_rows_per_block(rows, c, in_bytes, out_bytes, sub):
    """Pick T = rows-of-128-lanes per block.

    Budget counts input AND output blocks, double-buffered, and targets ~4 MiB
    total residency; for large images we also aim for >= 8 grid steps so the
    DMA pipeline has depth and v7x's two TensorCores can split the grid.
    """
    per_row_resident = c * 128 * (in_bytes + out_bytes) * 2  # in+out, double-buffered
    t_budget = max(sub, (4 * 1024 * 1024) // per_row_resident)
    t_split = _cdiv(rows, 8)  # >= 8 tiles when the image is big enough
    t = max(sub, min(t_budget, t_split))
    return _round_up(t, sub)


def normalization_forward(img, mean=_IMAGENET_MEAN, std=_IMAGENET_STD):
    """img: (1, C, H, W). Returns ((img.squeeze(0) - mean) / std).unsqueeze(0)."""
    assert img.ndim == 4 and img.shape[0] == 1, "module semantics: squeeze(0) needs batch==1"
    x = img[0]  # squeeze(0) -> (C, H, W)
    C, H, W = x.shape

    mean_vals = tuple(float(m) for m in mean)
    inv_std_vals = tuple(1.0 / float(s) for s in std)
    assert len(mean_vals) == C and len(inv_std_vals) == C

    in_dtype = x.dtype
    # torchvision Normalize only accepts float tensors; for integer inputs emit
    # float32 instead of truncating/wrapping back to the integer dtype.
    # TODO(synk): torchvision would raise on integer input; no [0,255]->[0,1] rescale is applied.
    out_dtype = in_dtype if jnp.issubdtype(in_dtype, jnp.floating) else jnp.float32
    in_bytes = jnp.dtype(in_dtype).itemsize
    out_bytes = jnp.dtype(out_dtype).itemsize
    sub = max(_MIN_SUBLANES.get(in_bytes, 8), _MIN_SUBLANES.get(out_bytes, 8))

    HW = H * W
    rows = _cdiv(HW, 128)                     # lane-dense rows of 128 elements
    T = _choose_rows_per_block(rows, C, in_bytes, out_bytes, sub)
    rows_p = _round_up(rows, T)
    HW_p = rows_p * 128
    R = rows_p // T                           # grid steps over the row-tile axis

    x_flat = x.reshape(C, HW)
    if HW_p != HW:                            # pad so every block is full (T, 128)
        x_flat = jnp.pad(x_flat, ((0, 0), (0, HW_p - HW)))
    x3 = x_flat.reshape(C, rows_p, 128)       # sublane- and lane-dense 3D slab

    # Real residency: in + out blocks, double-buffered; add generous headroom.
    block_pair_bytes = C * T * 128 * (in_bytes + out_bytes)
    vmem_limit = int(min(max(4 * block_pair_bytes, 16 * 1024 * 1024),
                         64 * 1024 * 1024))

    out3 = pl.pallas_call(
        _make_normalize_kernel(mean_vals, inv_std_vals),
        out_shape=jax.ShapeDtypeStruct((C, rows_p, 128), out_dtype),
        grid=(R,),
        in_specs=[pl.BlockSpec((C, T, 128), lambda r: (0, r, 0))],
        out_specs=pl.BlockSpec((C, T, 128), lambda r: (0, r, 0)),
        compiler_params=pltpu.CompilerParams(
            dimension_semantics=("parallel",),   # independent row tiles: v7x 2-TC split
            vmem_limit_bytes=vmem_limit,
        ),
    )(x3)

    out = out3.reshape(C, HW_p)[:, :HW].reshape(1, C, H, W)  # drop pad, unsqueeze(0)
    return out


if __name__ == "__main__":
    key = jax.random.PRNGKey(0)
    # Module semantics require batch=1 and 3 channels (ImageNet mean/std).
    img = jax.random.uniform(key, (1, 3, 16, 16), dtype=jnp.float32)

    out = jax.block_until_ready(normalization_forward(img))

    # Pure-JAX reference check.
    mean = jnp.array(_IMAGENET_MEAN, dtype=jnp.float32)
    std = jnp.array(_IMAGENET_STD, dtype=jnp.float32)
    ref = (img - mean[None, :, None, None]) / std[None, :, None, None]

    assert out.shape == img.shape
    assert out.dtype == img.dtype
    assert jnp.allclose(out, ref, atol=1e-5, rtol=1e-5), "mismatch vs reference"

    print("KERNEL_OK")
</pallas_src>

<mosaic_0001>
module attributes {stable_mosaic.version = 11 : i64} {
  func.func @kernel(%arg0: i32, %arg1: memref<3x8x128xf32, #tpu.memory_space<vmem>>, %arg2: memref<3x8x128xf32, #tpu.memory_space<vmem>>) attributes {dimension_semantics = [#tpu.dimension_semantics<parallel>], iteration_bounds = array<i64: 1>, scalar_prefetch = 0 : i64, scratch_operands = 0 : i64, tpu.core_type = #tpu.core_type<tc>, window_params = [{transform_indices = @transform_0, window_bounds = array<i64: 3, 8, 128>}, {transform_indices = @transform_1, window_bounds = array<i64: 3, 8, 128>}]} {
    %c0 = arith.constant 0 : index
    %c0_0 = arith.constant 0 : index
    %c0_1 = arith.constant 0 : index
    %0 = vector.load %arg1[%c0, %c0_0, %c0_1] : memref<3x8x128xf32, #tpu.memory_space<vmem>>, vector<1x8x128xf32>
    %1 = vector.shape_cast %0 : vector<1x8x128xf32> to vector<8x128xf32>
    %cst = arith.constant 4.850000e-01 : f32
    %2 = vector.broadcast %cst : f32 to vector<8x128xf32>
    %3 = arith.subf %1, %2 : vector<8x128xf32>
    %cst_2 = arith.constant 4.36681223 : f32
    %4 = vector.broadcast %cst_2 : f32 to vector<8x128xf32>
    %5 = arith.mulf %3, %4 : vector<8x128xf32>
    %c0_3 = arith.constant 0 : index
    %c0_4 = arith.constant 0 : index
    %c0_5 = arith.constant 0 : index
    %6 = vector.load %arg2[%c0_3, %c0_4, %c0_5] : memref<3x8x128xf32, #tpu.memory_space<vmem>>, vector<1x8x128xf32>
    %7 = vector.shape_cast %6 : vector<1x8x128xf32> to vector<8x128xf32>
    %8 = vector.shape_cast %5 : vector<8x128xf32> to vector<1x8x128xf32>
    tpu.vector_store %arg2[%c0_3, %c0_4, %c0_5], %8 {strides = array<i32>} : memref<3x8x128xf32, #tpu.memory_space<vmem>>, vector<1x8x128xf32>,
    %c1 = arith.constant 1 : index
    %c0_6 = arith.constant 0 : index
    %c0_7 = arith.constant 0 : index
    %9 = vector.load %arg1[%c1, %c0_6, %c0_7] : memref<3x8x128xf32, #tpu.memory_space<vmem>>, vector<1x8x128xf32>
    %10 = vector.shape_cast %9 : vector<1x8x128xf32> to vector<8x128xf32>
    %cst_8 = arith.constant 4.560000e-01 : f32
    %11 = vector.broadcast %cst_8 : f32 to vector<8x128xf32>
    %12 = arith.subf %10, %11 : vector<8x128xf32>
    %cst_9 = arith.constant 4.46428585 : f32
    %13 = vector.broadcast %cst_9 : f32 to vector<8x128xf32>
    %14 = arith.mulf %12, %13 : vector<8x128xf32>
    %c1_10 = arith.constant 1 : index
    %c0_11 = arith.constant 0 : index
    %c0_12 = arith.constant 0 : index
    %15 = vector.load %arg2[%c1_10, %c0_11, %c0_12] : memref<3x8x128xf32, #tpu.memory_space<vmem>>, vector<1x8x128xf32>
    %16 = vector.shape_cast %15 : vector<1x8x128xf32> to vector<8x128xf32>
    %17 = vector.shape_cast %14 : vector<8x128xf32> to vector<1x8x128xf32>
    tpu.vector_store %arg2[%c1_10, %c0_11, %c0_12], %17 {strides = array<i32>} : memref<3x8x128xf32, #tpu.memory_space<vmem>>, vector<1x8x128xf32>,
    %c2 = arith.constant 2 : index
    %c0_13 = arith.constant 0 : index
    %c0_14 = arith.constant 0 : index
    %18 = vector.load %arg1[%c2, %c0_13, %c0_14] : memref<3x8x128xf32, #tpu.memory_space<vmem>>, vector<1x8x128xf32>
    %19 = vector.shape_cast %18 : vector<1x8x128xf32> to vector<8x128xf32>
    %cst_15 = arith.constant 4.060000e-01 : f32
    %20 = vector.broadcast %cst_15 : f32 to vector<8x128xf32>
    %21 = arith.subf %19, %20 : vector<8x128xf32>
    %cst_16 = arith.constant 4.44444466 : f32
    %22 = vector.broadcast %cst_16 : f32 to vector<8x128xf32>
    %23 = arith.mulf %21, %22 : vector<8x128xf32>
    %c2_17 = arith.constant 2 : index
    %c0_18 = arith.constant 0 : index
    %c0_19 = arith.constant 0 : index
    %24 = vector.load %arg2[%c2_17, %c0_18, %c0_19] : memref<3x8x128xf32, #tpu.memory_space<vmem>>, vector<1x8x128xf32>
    %25 = vector.shape_cast %24 : vector<1x8x128xf32> to vector<8x128xf32>
    %26 = vector.shape_cast %23 : vector<8x128xf32> to vector<1x8x128xf32>
    tpu.vector_store %arg2[%c2_17, %c0_18, %c0_19], %26 {strides = array<i32>} : memref<3x8x128xf32, #tpu.memory_space<vmem>>, vector<1x8x128xf32>,
    return
  }
  func.func @transform_0(%arg0: i32) -> (i32, i32, i32) {
    %c0_i32 = arith.constant 0 : i32
    %c0_i32_0 = arith.constant 0 : i32
    %c0_i32_1 = arith.constant 0 : i32
    return %c0_i32, %arg0, %c0_i32_0 : i32, i32, i32
  }
  func.func @transform_1(%arg0: i32) -> (i32, i32, i32) {
    %c0_i32 = arith.constant 0 : i32
    %c0_i32_0 = arith.constant 0 : i32
    %c0_i32_1 = arith.constant 0 : i32
    return %c0_i32, %arg0, %c0_i32_0 : i32, i32, i32
  }
}

</mosaic_0001>

<llo_original>
// kernel: tpu_custom_call.1
$region0: #{tpu_custom_call.1}
  #allocation0 [shape = 'u32[]', space=smem, size = 0x4, offset = 0x4, fixed_abs, tag = 'smem constant byte address 0x4 - core index']
  #allocation1 [shape = 'u32[72,128]{1,0:T(1,128)}', space=vmem, size = 0x9000, scoped, tag = 'internal scratch']
  %s0 = inlined_call_operand.hbm [shape: f32[3,8,128], index: 0, kind: input, shape index: {}]
  %s1 = inlined_call_operand.hbm [shape: f32[3,8,128], index: 1, kind: output, shape index: {}]
  %s2 = sld [smem:[#allocation0]]
  $region18: #{tpu_custom_call.1} parent=0
    _
  %s4 = ssub.s32 1, %s2
  %s5 = scalar_select 0, %s4, %s2
  $region1: #{tpu_custom_call.1} parent=0
    #allocation2 [shape = 'u8[12288]{0}', space=vmem, size = 0x3000, scoped, tag = 'input window, operand 0, single buffered']
    #allocation3 [shape = 's32[1]{0}', space=sflag, size = 0x4, scoped, tag = 'scoped memory for tpu_custom_call.1']
    #allocation4 [shape = 's32[1]{0}', space=sflag, size = 0x4, scoped, tag = 'scoped memory for tpu_custom_call.1']
    #allocation5 [shape = 'u8[12288]{0}', space=vmem, size = 0x3000, scoped, tag = 'output window, operand 0, single buffered']
    %6 = vsyncpa [#allocation3], 0
    %7 = vsyncpa [#allocation4], 0
    // Predicated region
    $region2: #{tpu_custom_call.1} parent=1 // pred_check
      _
    $region3: #{tpu_custom_call.1} parent=1 // pred_check_branch
      %9 = sbr.rel (0) target = $region5
    $region4: #{tpu_custom_call.1} parent=1 // pred_region
      %11 = vsyncadd [#allocation3], 0
      %s12 = sshll.u32 %s0, 4
      %s13 = int_to_ptr.hbm [resolvable:$true] %s12
      %s14 = sshll.u32 [#allocation2], 4
      %s15 = int_to_ptr.vmem [resolvable:$true] %s14
      %20 = dma.hbm_to_vmem [thread:$0]  %s13, 384, %s15, [#allocation3], 128, 128, 8
    $region5: #{tpu_custom_call.1} parent=1 // pred_fallthru
      _
    // Predicated region
    $region6: #{tpu_custom_call.1} parent=1 // pred_check
      _
    $region7: #{tpu_custom_call.1} parent=1 // pred_check_branch
      %22 = sbr.rel (0) target = $region9
    $region8: #{tpu_custom_call.1} parent=1 // pred_region
      %24 = dma.done [#allocation3], 384
    $region9: #{tpu_custom_call.1} parent=1 // pred_fallthru
      _
    %v25 = vld [vmem:[#allocation2] sm:$0xff]
    %v26 = vsub.f32 %v25, 0.485
    %v27 = vmul.f32 %v26, 4.366812
    %28 = vst [vmem:[#allocation5] sm:$0xff] %v27
    %s29 = scalar_lea.vmem [#allocation2], 8
    %v30 = vld [vmem:[%s29] sm:$0xff]
    %v31 = vsub.f32 %v30, 0.456
    %v32 = vmul.f32 %v31, 4.464286
    %s33 = scalar_lea.vmem [#allocation5], 8
    %34 = vst [vmem:[%s33] sm:$0xff] %v32
    %s35 = scalar_lea.vmem [#allocation2], 16
    %v36 = vld [vmem:[%s35] sm:$0xff]
    %v37 = vsub.f32 %v36, 0.406
    %v38 = vmul.f32 %v37, 4.4444447
    %s39 = scalar_lea.vmem [#allocation5], 16
    %40 = vst [vmem:[%s39] sm:$0xff] %v38
    // Predicated region
    $region10: #{tpu_custom_call.1} parent=1 // pred_check
      _
    $region11: #{tpu_custom_call.1} parent=1 // pred_check_branch
      %42 = sbr.rel (0) target = $region13
    $region12: #{tpu_custom_call.1} parent=1 // pred_region
      %44 = vsyncadd [#allocation4], 0
      %s45 = sshll.u32 [#allocation5], 4
      %s46 = int_to_ptr.vmem [resolvable:$true] %s45
      %s47 = sshll.u32 %s1, 4
      %s48 = int_to_ptr.hbm [resolvable:$true] %s47
      %53 = dma.vmem_to_hbm [thread:$0]  %s46, 384, %s48, [#allocation4], 128, 128, 8
    $region13: #{tpu_custom_call.1} parent=1 // pred_fallthru
      _
    // Predicated region
    $region14: #{tpu_custom_call.1} parent=1 // pred_check
      _
    $region15: #{tpu_custom_call.1} parent=1 // pred_check_branch
      %55 = sbr.rel (0) target = $region17
    $region16: #{tpu_custom_call.1} parent=1 // pred_region
      %57 = dma.done [#allocation4], 384
    $region17: #{tpu_custom_call.1} parent=1 // pred_fallthru
      _
    %58 = vsyncpa [#allocation3], 1
    %59 = vsyncpa [#allocation4], 1

</llo_original>
